<compile_context>
chip_gen: v7x
topology: tpu7x:2x2x1
jax: 0.10.0
libtpu: 0.0.40
codegen_flags: <defaults>
</compile_context>

<pallas_src>
import functools

import jax
import jax.numpy as jnp
from jax.experimental import pallas as pl
from jax.experimental.pallas import tpu as pltpu


def _mlp_kernel(x_ref, w1_ref, b1_ref, w2_ref, b2_ref, w3_ref, b3_ref, o_ref):
    """Fused 3-layer MLP on one (TB, F) batch tile.

    x / W are bf16 (MXU-native), accumulation + bias + ReLU in f32.
    """
    x = x_ref[...]                                                     # bf16 (TB, F)
    h1 = jnp.dot(x, w1_ref[...], preferred_element_type=jnp.float32)  # f32 (TB, 256)
    h1 = jnp.maximum(h1 + b1_ref[...], 0.0)
    h2 = jnp.dot(h1.astype(jnp.bfloat16), w2_ref[...],
                 preferred_element_type=jnp.float32)                  # f32 (TB, 64)
    h2 = jnp.maximum(h2 + b2_ref[...], 0.0)
    out = jnp.dot(h2.astype(jnp.bfloat16), w3_ref[...],
                  preferred_element_type=jnp.float32) + b3_ref[...]   # f32 (TB, 2)
    o_ref[...] = out.astype(o_ref.dtype)


def _round_up(x, m):
    return ((x + m - 1) // m) * m


@functools.partial(jax.jit, static_argnames=())
def hog_classifier_forward(x, params):
    """Forward pass equivalent to HOGClassifier.forward (inference).

    x: (B, ...) or (F,) float. Returns (B, 2) float32 logits.
    """
    if x.ndim == 1:
        x = x[None, :]                 # unsqueeze(0)
    x = x.reshape(x.shape[0], -1)      # nn.Flatten
    x = x.astype(jnp.float32)

    w1, b1, w2, b2, w3, b3 = params
    B, F = x.shape
    H1 = w1.shape[1]   # 256
    H2 = w2.shape[1]   # 64
    O = w3.shape[1]    # 2

    # Batch tile: multiple of 8 (f32 sublane), capped at 256 (v6e/v7x MXU rows).
    TB = min(256, _round_up(B, 8))
    B_pad = _round_up(B, TB)
    if B_pad != B:
        x = jnp.pad(x, ((0, B_pad - B), (0, 0)))
    grid = (B_pad // TB,)

    # bf16 matmul operands (halves HBM/DMA traffic, native MXU rate); biases stay f32.
    x_bf = x.astype(jnp.bfloat16)
    w1_bf = w1.astype(jnp.bfloat16)
    w2_bf = w2.astype(jnp.bfloat16)
    w3_bf = w3.astype(jnp.bfloat16)
    b1_f = b1.astype(jnp.float32)
    b2_f = b2.astype(jnp.float32)
    b3_f = b3.astype(jnp.float32)

    resident = lambda shape: pl.BlockSpec(shape, lambda i: (0, 0))  # VMEM-resident

    flops = 2 * B_pad * (F * H1 + H1 * H2 + H2 * O)
    bytes_accessed = (
        B_pad * F * 2                                   # x (bf16)
        + (F * H1 + H1 * H2 + H2 * O) * 2               # weights (bf16)
        + (H1 + H2 + O) * 4                             # biases (f32)
        + B_pad * O * 4                                 # output (f32)
    )

    out = pl.pallas_call(
        _mlp_kernel,
        out_shape=jax.ShapeDtypeStruct((B_pad, O), jnp.float32),
        grid=grid,
        in_specs=[
            pl.BlockSpec((TB, F), lambda i: (i, 0)),    # streamed activations
            resident((F, H1)), resident((1, H1)),
            resident((H1, H2)), resident((1, H2)),
            resident((H2, O)), resident((1, O)),
        ],
        out_specs=pl.BlockSpec((TB, O), lambda i: (i, 0)),
        compiler_params=pltpu.CompilerParams(
            dimension_semantics=("parallel",),           # shard tiles across v7x's 2 TCs
        ),
        cost_estimate=pl.CostEstimate(
            flops=flops, transcendentals=0, bytes_accessed=bytes_accessed),
    )(x_bf, w1_bf, b1_f, w2_bf, b2_f, w3_bf, b3_f)

    return out[:B]


def init_params(input_length, key):
    """Deterministic init mimicking PyTorch Linear default (uniform ±1/sqrt(fan_in))."""
    def linear(key, fan_in, fan_out):
        kw, kb = jax.random.split(key)
        bound = 1.0 / jnp.sqrt(jnp.float32(fan_in))
        # stored as (in, out) so forward is x @ W + b
        w = jax.random.uniform(kw, (fan_in, fan_out), jnp.float32, -bound, bound)
        b = jax.random.uniform(kb, (1, fan_out), jnp.float32, -bound, bound)
        return w, b

    k1, k2, k3 = jax.random.split(key, 3)
    w1, b1 = linear(k1, input_length, 256)
    w2, b2 = linear(k2, 256, 64)
    w3, b3 = linear(k3, 64, 2)
    return (w1, b1, w2, b2, w3, b3)


def _reference_forward(x, params):
    """Plain-JAX f32 reference for correctness check."""
    if x.ndim == 1:
        x = x[None, :]
    x = x.reshape(x.shape[0], -1).astype(jnp.float32)
    w1, b1, w2, b2, w3, b3 = params
    h1 = jnp.maximum(x @ w1 + b1, 0.0)
    h2 = jnp.maximum(h1 @ w2 + b2, 0.0)
    return h2 @ w3 + b3


def get_score(x, params):
    """Equivalent of HOGClassifier.get_score for a single sample."""
    logits = hog_classifier_forward(x, params)
    return float(logits[0, 1] - logits[0, 0])


# TODO(synk): train_model / test_model_on_train are host-side training loops
# (CrossEntropyLoss + SGD) and are out of scope for a forward-pass kernel.


if __name__ == "__main__":
    key = jax.random.PRNGKey(0)
    kp, kx = jax.random.split(key)

    batch = 2
    input_length = 128   # HOG feature vector length
    params = init_params(input_length, kp)
    x = jax.random.normal(kx, (batch, input_length), jnp.float32)

    logits = hog_classifier_forward(x, params)
    jax.block_until_ready(logits)

    ref = _reference_forward(x, params)
    assert logits.shape == (batch, 2)
    # bf16 matmul inputs with f32 accumulation -> loosened tolerance vs f32 reference
    assert jnp.allclose(logits, ref, atol=5e-2, rtol=5e-2)

    # also exercise the 1-D input path (get_score-style single sample)
    logits_1d = hog_classifier_forward(x[0], params)
    jax.block_until_ready(logits_1d)
    assert logits_1d.shape == (1, 2)
    _ = get_score(x[0], params)

    # a larger batch to exercise the multi-tile grid path
    xb = jax.random.normal(kx, (300, input_length), jnp.float32)
    logits_b = hog_classifier_forward(xb, params)
    jax.block_until_ready(logits_b)
    assert logits_b.shape == (300, 2)
    assert jnp.allclose(logits_b, _reference_forward(xb, params), atol=5e-2, rtol=5e-2)

    print("KERNEL_OK")
</pallas_src>

<mosaic_0001>
module attributes {stable_mosaic.version = 11 : i64} {
  func.func @_mlp_kernel(%arg0: i32, %arg1: memref<8x128xbf16, #tpu.memory_space<vmem>>, %arg2: memref<128x256xbf16, #tpu.memory_space<vmem>>, %arg3: memref<1x256xf32, #tpu.memory_space<vmem>>, %arg4: memref<256x64xbf16, #tpu.memory_space<vmem>>, %arg5: memref<1x64xf32, #tpu.memory_space<vmem>>, %arg6: memref<64x2xbf16, #tpu.memory_space<vmem>>, %arg7: memref<1x2xf32, #tpu.memory_space<vmem>>, %arg8: memref<8x2xf32, #tpu.memory_space<vmem>>) attributes {dimension_semantics = [#tpu.dimension_semantics<parallel>], iteration_bounds = array<i64: 1>, scalar_prefetch = 0 : i64, scratch_operands = 0 : i64, tpu.core_type = #tpu.core_type<tc>, window_params = [{transform_indices = @transform_0, window_bounds = array<i64: 8, 128>}, {pipeline_mode = #tpu.pipeline_mode<synchronous>, transform_indices = @transform_1, window_bounds = array<i64: 128, 256>}, {pipeline_mode = #tpu.pipeline_mode<synchronous>, transform_indices = @transform_2, window_bounds = array<i64: 1, 256>}, {pipeline_mode = #tpu.pipeline_mode<synchronous>, transform_indices = @transform_3, window_bounds = array<i64: 256, 64>}, {pipeline_mode = #tpu.pipeline_mode<synchronous>, transform_indices = @transform_4, window_bounds = array<i64: 1, 64>}, {pipeline_mode = #tpu.pipeline_mode<synchronous>, transform_indices = @transform_5, window_bounds = array<i64: 64, 2>}, {pipeline_mode = #tpu.pipeline_mode<synchronous>, transform_indices = @transform_6, window_bounds = array<i64: 1, 2>}, {transform_indices = @transform_7, window_bounds = array<i64: 8, 2>}]} {
    %c0 = arith.constant 0 : index
    %c0_0 = arith.constant 0 : index
    %0 = vector.load %arg1[%c0, %c0_0] : memref<8x128xbf16, #tpu.memory_space<vmem>>, vector<8x128xbf16>
    %c0_1 = arith.constant 0 : index
    %c0_2 = arith.constant 0 : index
    %1 = vector.load %arg2[%c0_1, %c0_2] : memref<128x256xbf16, #tpu.memory_space<vmem>>, vector<128x256xbf16>
    %cst = arith.constant dense<0.000000e+00> : vector<8x256xf32>
    %2 = tpu.matmul %0, %1, %cst {dimension_numbers = #tpu.dot_dimension_numbers<[1], [0], [0], [1], [0, 0, 1, 1], [], []>} : vector<8x128xbf16>, vector<128x256xbf16>, vector<8x256xf32> -> vector<8x256xf32>
    %c0_3 = arith.constant 0 : index
    %c0_4 = arith.constant 0 : index
    %3 = vector.load %arg3[%c0_3, %c0_4] : memref<1x256xf32, #tpu.memory_space<vmem>>, vector<1x256xf32>
    %4 = vector.broadcast %3 : vector<1x256xf32> to vector<8x256xf32>
    %5 = arith.addf %2, %4 : vector<8x256xf32>
    %cst_5 = arith.constant 0.000000e+00 : f32
    %6 = vector.broadcast %cst_5 : f32 to vector<8x256xf32>
    %7 = arith.maximumf %5, %6 : vector<8x256xf32>
    %8 = arith.truncf %7 : vector<8x256xf32> to vector<8x256xbf16>
    %c0_6 = arith.constant 0 : index
    %c0_7 = arith.constant 0 : index
    %9 = vector.load %arg4[%c0_6, %c0_7] : memref<256x64xbf16, #tpu.memory_space<vmem>>, vector<256x64xbf16>
    %cst_8 = arith.constant dense<0.000000e+00> : vector<8x64xf32>
    %10 = tpu.matmul %8, %9, %cst_8 {dimension_numbers = #tpu.dot_dimension_numbers<[1], [0], [0], [1], [0, 0, 1, 1], [], []>} : vector<8x256xbf16>, vector<256x64xbf16>, vector<8x64xf32> -> vector<8x64xf32>
    %c0_9 = arith.constant 0 : index
    %c0_10 = arith.constant 0 : index
    %11 = vector.load %arg5[%c0_9, %c0_10] : memref<1x64xf32, #tpu.memory_space<vmem>>, vector<1x64xf32>
    %12 = vector.broadcast %11 : vector<1x64xf32> to vector<8x64xf32>
    %13 = arith.addf %10, %12 : vector<8x64xf32>
    %cst_11 = arith.constant 0.000000e+00 : f32
    %14 = vector.broadcast %cst_11 : f32 to vector<8x64xf32>
    %15 = arith.maximumf %13, %14 : vector<8x64xf32>
    %16 = arith.truncf %15 : vector<8x64xf32> to vector<8x64xbf16>
    %c0_12 = arith.constant 0 : index
    %c0_13 = arith.constant 0 : index
    %17 = vector.load %arg6[%c0_12, %c0_13] : memref<64x2xbf16, #tpu.memory_space<vmem>>, vector<64x2xbf16>
    %cst_14 = arith.constant dense<0.000000e+00> : vector<8x2xf32>
    %18 = tpu.matmul %16, %17, %cst_14 {dimension_numbers = #tpu.dot_dimension_numbers<[1], [0], [0], [1], [0, 0, 1, 1], [], []>} : vector<8x64xbf16>, vector<64x2xbf16>, vector<8x2xf32> -> vector<8x2xf32>
    %c0_15 = arith.constant 0 : index
    %c0_16 = arith.constant 0 : index
    %19 = vector.load %arg7[%c0_15, %c0_16] : memref<1x2xf32, #tpu.memory_space<vmem>>, vector<1x2xf32>
    %20 = vector.broadcast %19 : vector<1x2xf32> to vector<8x2xf32>
    %21 = arith.addf %18, %20 : vector<8x2xf32>
    %c0_17 = arith.constant 0 : index
    %c0_18 = arith.constant 0 : index
    %22 = vector.load %arg8[%c0_17, %c0_18] : memref<8x2xf32, #tpu.memory_space<vmem>>, vector<8x2xf32>
    tpu.vector_store %arg8[%c0_17, %c0_18], %21 {strides = array<i32>} : memref<8x2xf32, #tpu.memory_space<vmem>>, vector<8x2xf32>,
    return
  }
  func.func @transform_0(%arg0: i32) -> (i32, i32) {
    %c0_i32 = arith.constant 0 : i32
    %c0_i32_0 = arith.constant 0 : i32
    return %arg0, %c0_i32 : i32, i32
  }
  func.func @transform_1(%arg0: i32) -> (i32, i32) {
    %c0_i32 = arith.constant 0 : i32
    %c0_i32_0 = arith.constant 0 : i32
    %c0_i32_1 = arith.constant 0 : i32
    return %c0_i32, %c0_i32_0 : i32, i32
  }
  func.func @transform_2(%arg0: i32) -> (i32, i32) {
    %c0_i32 = arith.constant 0 : i32
    %c0_i32_0 = arith.constant 0 : i32
    %c0_i32_1 = arith.constant 0 : i32
    return %c0_i32, %c0_i32_0 : i32, i32
  }
  func.func @transform_3(%arg0: i32) -> (i32, i32) {
    %c0_i32 = arith.constant 0 : i32
    %c0_i32_0 = arith.constant 0 : i32
    %c0_i32_1 = arith.constant 0 : i32
    return %c0_i32, %c0_i32_0 : i32, i32
  }
  func.func @transform_4(%arg0: i32) -> (i32, i32) {
    %c0_i32 = arith.constant 0 : i32
    %c0_i32_0 = arith.constant 0 : i32
    %c0_i32_1 = arith.constant 0 : i32
    return %c0_i32, %c0_i32_0 : i32, i32
  }
  func.func @transform_5(%arg0: i32) -> (i32, i32) {
    %c0_i32 = arith.constant 0 : i32
    %c0_i32_0 = arith.constant 0 : i32
    %c0_i32_1 = arith.constant 0 : i32
    return %c0_i32, %c0_i32_0 : i32, i32
  }
  func.func @transform_6(%arg0: i32) -> (i32, i32) {
    %c0_i32 = arith.constant 0 : i32
    %c0_i32_0 = arith.constant 0 : i32
    %c0_i32_1 = arith.constant 0 : i32
    return %c0_i32, %c0_i32_0 : i32, i32
  }
  func.func @transform_7(%arg0: i32) -> (i32, i32) {
    %c0_i32 = arith.constant 0 : i32
    %c0_i32_0 = arith.constant 0 : i32
    return %arg0, %c0_i32 : i32, i32
  }
}

</mosaic_0001>

<llo_original>
// kernel: hog_classifier_forward.1
$region0: #{hog_classifier_forward.1}
  #allocation0 [shape = 'u32[]', space=smem, size = 0x4, offset = 0x4, fixed_abs, tag = 'smem constant byte address 0x4 - core index']
  #allocation1 [shape = 'u32[144,128]{1,0:T(1,128)}', space=vmem, size = 0x12000, scoped, tag = 'internal scratch']
  %s0 = inlined_call_operand.vmem [shape: bf16[8,128], index: 0, kind: input, shape index: {}]
  %s1 = inlined_call_operand.vmem [shape: bf16[128,256], index: 1, kind: input, shape index: {}]
  %s2 = inlined_call_operand.vmem [shape: f32[1,256], index: 2, kind: input, shape index: {}]
  %s3 = inlined_call_operand.vmem [shape: bf16[256,64], index: 3, kind: input, shape index: {}]
  %s4 = inlined_call_operand.vmem [shape: f32[1,64], index: 4, kind: input, shape index: {}]
  %s5 = inlined_call_operand.vmem [shape: bf16[64,2], index: 5, kind: input, shape index: {}]
  %s6 = inlined_call_operand.vmem [shape: f32[1,2], index: 6, kind: input, shape index: {}]
  %s7 = inlined_call_operand.vmem [shape: f32[8,2], index: 7, kind: output, shape index: {}]
  %s8 = sld [smem:[#allocation0]]
  $region38: #{hog_classifier_forward.1} parent=0
    _
  %s10 = ssub.s32 1, %s8
  %s11 = scalar_select 0, %s10, %s8
  // Predicated region
  $region2: #{hog_classifier_forward.1} parent=0 // pred_check
    _
  $region3: #{hog_classifier_forward.1} parent=0 // pred_check_branch
    %13 = sbr.rel (0) target = $region5
  $region4: #{hog_classifier_forward.1} parent=0 // pred_region
    _
  $region5: #{hog_classifier_forward.1} parent=0 // pred_fallthru
    _
  // Predicated region
  $region6: #{hog_classifier_forward.1} parent=0 // pred_check
    _
  $region7: #{hog_classifier_forward.1} parent=0 // pred_check_branch
    %15 = sbr.rel (0) target = $region9
  $region8: #{hog_classifier_forward.1} parent=0 // pred_region
    _
  $region9: #{hog_classifier_forward.1} parent=0 // pred_fallthru
    _
  // Predicated region
  $region10: #{hog_classifier_forward.1} parent=0 // pred_check
    _
  $region11: #{hog_classifier_forward.1} parent=0 // pred_check_branch
    %17 = sbr.rel (0) target = $region13
  $region12: #{hog_classifier_forward.1} parent=0 // pred_region
    _
  $region13: #{hog_classifier_forward.1} parent=0 // pred_fallthru
    _
  // Predicated region
  $region14: #{hog_classifier_forward.1} parent=0 // pred_check
    _
  $region15: #{hog_classifier_forward.1} parent=0 // pred_check_branch
    %19 = sbr.rel (0) target = $region17
  $region16: #{hog_classifier_forward.1} parent=0 // pred_region
    _
  $region17: #{hog_classifier_forward.1} parent=0 // pred_fallthru
    _
  // Predicated region
  $region18: #{hog_classifier_forward.1} parent=0 // pred_check
    _
  $region19: #{hog_classifier_forward.1} parent=0 // pred_check_branch
    %21 = sbr.rel (0) target = $region21
  $region20: #{hog_classifier_forward.1} parent=0 // pred_region
    _
  $region21: #{hog_classifier_forward.1} parent=0 // pred_fallthru
    _
  // Predicated region
  $region22: #{hog_classifier_forward.1} parent=0 // pred_check
    _
  $region23: #{hog_classifier_forward.1} parent=0 // pred_check_branch
    %23 = sbr.rel (0) target = $region25
  $region24: #{hog_classifier_forward.1} parent=0 // pred_region
    _
  $region25: #{hog_classifier_forward.1} parent=0 // pred_fallthru
    _
  // Predicated region
  $region26: #{hog_classifier_forward.1} parent=0 // pred_check
    _
  $region27: #{hog_classifier_forward.1} parent=0 // pred_check_branch
    %25 = sbr.rel (0) target = $region29
  $region28: #{hog_classifier_forward.1} parent=0 // pred_region
    _
  $region29: #{hog_classifier_forward.1} parent=0 // pred_fallthru
    _
  %v27 = vld [vmem:[%s0] sm:$0xf]
  %v28 = vld [vmem:[%s1] sm:$0xff]
  %v29 = vld [vmem:[%s1 + $0x8] sm:$0xff]
  %v30 = vld [vmem:[%s1 + $0x10] sm:$0xff]
  %v31 = vld [vmem:[%s1 + $0x18] sm:$0xff]
  %v32 = vld [vmem:[%s1 + $0x20] sm:$0xff]
  %v33 = vld [vmem:[%s1 + $0x28] sm:$0xff]
  %v34 = vld [vmem:[%s1 + $0x30] sm:$0xff]
  %v35 = vld [vmem:[%s1 + $0x38] sm:$0xff]
  %v36 = vld [vmem:[%s1 + $0x40] sm:$0xff]
  %v37 = vld [vmem:[%s1 + $0x48] sm:$0xff]
  %v38 = vld [vmem:[%s1 + $0x50] sm:$0xff]
  %v39 = vld [vmem:[%s1 + $0x58] sm:$0xff]
  %v40 = vld [vmem:[%s1 + $0x60] sm:$0xff]
  %v41 = vld [vmem:[%s1 + $0x68] sm:$0xff]
  %v42 = vld [vmem:[%s1 + $0x70] sm:$0xff]
  %v43 = vld [vmem:[%s1 + $0x78] sm:$0xff]
  %v44 = vld [vmem:[%s2] sm:$0x3]
  %v46 = vlaneseq
  %v47 = vshrl.u32 %v46, 7
  %v48 = vsub.s32 0, %v47
  %v49 = vrot.slane %v44, %v48
  %v50 = vlaneseq
  %v51 = vshrl.u32 %v50, 7
  %v52 = vsub.s32 1, %v51
  %v53 = vrot.slane %v44, %v52
  %v72 = vunpack.c.l.b16 %v28
  %v73 = vunpack.c.h.b16 %v28
  %v74 = vunpack.c.l.b16 %v29
  %v75 = vunpack.c.h.b16 %v29
  %v76 = vunpack.c.l.b16 %v30
  %v77 = vunpack.c.h.b16 %v30
  %v78 = vunpack.c.l.b16 %v31
  %v79 = vunpack.c.h.b16 %v31
  %v80 = vunpack.c.l.b16 %v32
  %v81 = vunpack.c.h.b16 %v32
  %v82 = vunpack.c.l.b16 %v33
  %v83 = vunpack.c.h.b16 %v33
  %v84 = vunpack.c.l.b16 %v34
  %v85 = vunpack.c.h.b16 %v34
  %v86 = vunpack.c.l.b16 %v35
  %v87 = vunpack.c.h.b16 %v35
  %v88 = vunpack.c.l.b16 %v36
  %v89 = vunpack.c.h.b16 %v36
  %v90 = vunpack.c.l.b16 %v37
  %v91 = vunpack.c.h.b16 %v37
  %v92 = vunpack.c.l.b16 %v38
  %v93 = vunpack.c.h.b16 %v38
  %v94 = vunpack.c.l.b16 %v39
  %v95 = vunpack.c.h.b16 %v39
  %v96 = vunpack.c.l.b16 %v40
  %v97 = vunpack.c.h.b16 %v40
  %v98 = vunpack.c.l.b16 %v41
  %v99 = vunpack.c.h.b16 %v41
  %v100 = vunpack.c.l.b16 %v42
  %v101 = vunpack.c.h.b16 %v42
  %v102 = vunpack.c.l.b16 %v43
  %v103 = vunpack.c.h.b16 %v43
  %v104 = vpack.c.b16 %v74, %v72
  %v105 = vpack.c.b16 %v75, %v73
  %v106 = vpack.c.b16 %v78, %v76
  %v107 = vpack.c.b16 %v79, %v77
  %v108 = vpack.c.b16 %v82, %v80
  %v109 = vpack.c.b16 %v83, %v81
  %v110 = vpack.c.b16 %v86, %v84
  %v111 = vpack.c.b16 %v87, %v85
  %v112 = vpack.c.b16 %v90, %v88
  %v113 = vpack.c.b16 %v91, %v89
  %v114 = vpack.c.b16 %v94, %v92
  %v115 = vpack.c.b16 %v95, %v93
  %v116 = vpack.c.b16 %v98, %v96
  %v117 = vpack.c.b16 %v99, %v97
  %v118 = vpack.c.b16 %v102, %v100
  %v119 = vpack.c.b16 %v103, %v101
  %136 = vmatprep.subr.bf16.mxu0 %v105
  %137 = vmatpush1.bf16.msra.mxu0 %v104
  %138 = vmatprep.subr.bf16.mxu0 %v107
  %139 = vmatpush1.bf16.msra.mxu0 %v106
  %140 = vmatprep.subr.bf16.mxu0 %v109
  %141 = vmatpush1.bf16.msra.mxu0 %v108
  %142 = vmatprep.subr.bf16.mxu0 %v111
  %143 = vmatpush1.bf16.msra.mxu0 %v110
  %144 = vmatprep.subr.bf16.mxu0 %v113
  %145 = vmatpush1.bf16.msra.mxu0 %v112
  %146 = vmatprep.subr.bf16.mxu0 %v115
  %147 = vmatpush1.bf16.msra.mxu0 %v114
  %148 = vmatprep.subr.bf16.mxu0 %v117
  %149 = vmatpush1.bf16.msra.mxu0 %v116
  %150 = vmatprep.subr.bf16.mxu0 %v119
  %151 = vmatpush1.bf16.msra.mxu0 %v118
  %152 = vmatprep.subr.bf16.mxu0 0
  %153 = vmatpush1.bf16.msra.mxu0 0
  %154 = vmatprep.subr.bf16.mxu0 0
  %155 = vmatpush1.bf16.msra.mxu0 0
  %156 = vmatprep.subr.bf16.mxu0 0
  %157 = vmatpush1.bf16.msra.mxu0 0
  %158 = vmatprep.subr.bf16.mxu0 0
  %159 = vmatpush1.bf16.msra.mxu0 0
  %160 = vmatprep.subr.bf16.mxu0 0
  %161 = vmatpush1.bf16.msra.mxu0 0
  %162 = vmatprep.subr.bf16.mxu0 0
  %163 = vmatpush1.bf16.msra.mxu0 0
  %164 = vmatprep.subr.bf16.mxu0 0
  %165 = vmatpush1.bf16.msra.mxu0 0
  %166 = vmatprep.subr.bf16.mxu0 0
  %167 = vmatpush1.bf16.msra.mxu0 0
  %168 = vmatprep.mubr.bf16.mxu0 0
  %169 = vmatmul.mubr.bf16.gmra.mrb[0].mxu0 %v27
  %v170 = vpop.f32.mrb[0].mxu0
  %v171 = vadd.f32 %v49, %v170
  %v172 = vpop.f32.mrb[0].mxu0
  %v173 = vadd.f32 %v53, %v172
  %v174 = vpop.f32.mrb[0].mxu0
  %v175 = vpop.f32.mrb[0].mxu0
  %176 = vdwg.mxu0
  %v177 = vmax.f32 %v171, 0.0
  %v178 = vmax.f32 %v173, 0.0
  %v179 = vpack.c.bf16 %v177, %v177
  %v180 = vpack.c.bf16 %v178, %v178
  %v181 = vld [vmem:[%s3] sm:$0xf]
  %v182 = vld [vmem:[%s3 + $0x4] sm:$0xf]
  %v183 = vld [vmem:[%s3 + $0x8] sm:$0xf]
  %v184 = vld [vmem:[%s3 + $0xc] sm:$0xf]
  %v185 = vld [vmem:[%s3 + $0x10] sm:$0xf]
  %v186 = vld [vmem:[%s3 + $0x14] sm:$0xf]
  %v187 = vld [vmem:[%s3 + $0x18] sm:$0xf]
  %v188 = vld [vmem:[%s3 + $0x1c] sm:$0xf]
  %v189 = vld [vmem:[%s3 + $0x20] sm:$0xf]
  %v190 = vld [vmem:[%s3 + $0x24] sm:$0xf]
  %v191 = vld [vmem:[%s3 + $0x28] sm:$0xf]
  %v192 = vld [vmem:[%s3 + $0x2c] sm:$0xf]
  %v193 = vld [vmem:[%s3 + $0x30] sm:$0xf]
  %v194 = vld [vmem:[%s3 + $0x34] sm:$0xf]
  %v195 = vld [vmem:[%s3 + $0x38] sm:$0xf]
  %v196 = vld [vmem:[%s3 + $0x3c] sm:$0xf]
  %v197 = vld [vmem:[%s3 + $0x40] sm:$0xf]
  %v198 = vld [vmem:[%s3 + $0x44] sm:$0xf]
  %v199 = vld [vmem:[%s3 + $0x48] sm:$0xf]
  %v200 = vld [vmem:[%s3 + $0x4c] sm:$0xf]
  %v201 = vld [vmem:[%s3 + $0x50] sm:$0xf]
  %v202 = vld [vmem:[%s3 + $0x54] sm:$0xf]
  %v203 = vld [vmem:[%s3 + $0x58] sm:$0xf]
  %v204 = vld [vmem:[%s3 + $0x5c] sm:$0xf]
  %v205 = vld [vmem:[%s3 + $0x60] sm:$0xf]
  %v206 = vld [vmem:[%s3 + $0x64] sm:$0xf]
  %v207 = vld [vmem:[%s3 + $0x68] sm:$0xf]
  %v208 = vld [vmem:[%s3 + $0x6c] sm:$0xf]
  %v209 = vld [vmem:[%s3 + $0x70] sm:$0xf]
  %v210 = vld [vmem:[%s3 + $0x74] sm:$0xf]
  %v211 = vld [vmem:[%s3 + $0x78] sm:$0xf]
  %v212 = vld [vmem:[%s3 + $0x7c] sm:$0xf]
  %v213 = vld [vmem:[%s4] sm:$0x1]
  %v215 = vlaneseq
  %v216 = vshrl.u32 %v215, 7
  %v217 = vsub.s32 0, %v216
  %v218 = vrot.slane %v213, %v217
  %v252 = vunpack.c.l.b16 %v181
  %v253 = vunpack.c.l.b16 %v182
  %v254 = vunpack.c.l.b16 %v183
  %v255 = vunpack.c.l.b16 %v184
  %v256 = vunpack.c.l.b16 %v185
  %v257 = vunpack.c.l.b16 %v186
  %v258 = vunpack.c.l.b16 %v187
  %v259 = vunpack.c.l.b16 %v188
  %v260 = vunpack.c.l.b16 %v189
  %v261 = vunpack.c.l.b16 %v190
  %v262 = vunpack.c.l.b16 %v191
  %v263 = vunpack.c.l.b16 %v192
  %v264 = vunpack.c.l.b16 %v193
  %v265 = vunpack.c.l.b16 %v194
  %v266 = vunpack.c.l.b16 %v195
  %v267 = vunpack.c.l.b16 %v196
  %v268 = vunpack.c.l.b16 %v197
  %v269 = vunpack.c.l.b16 %v198
  %v270 = vunpack.c.l.b16 %v199
  %v271 = vunpack.c.l.b16 %v200
  %v272 = vunpack.c.l.b16 %v201
  %v273 = vunpack.c.l.b16 %v202
  %v274 = vunpack.c.l.b16 %v203
  %v275 = vunpack.c.l.b16 %v204
  %v276 = vunpack.c.l.b16 %v205
  %v277 = vunpack.c.l.b16 %v206
  %v278 = vunpack.c.l.b16 %v207
  %v279 = vunpack.c.l.b16 %v208
  %v280 = vunpack.c.l.b16 %v209
  %v281 = vunpack.c.l.b16 %v210
  %v282 = vunpack.c.l.b16 %v211
  %v283 = vunpack.c.l.b16 %v212
  %v284 = vpack.c.b16 %v253, %v252
  %v285 = vpack.c.b16 %v255, %v254
  %v286 = vpack.c.b16 %v257, %v256
  %v287 = vpack.c.b16 %v259, %v258
  %v288 = vpack.c.b16 %v261, %v260
  %v289 = vpack.c.b16 %v263, %v262
  %v290 = vpack.c.b16 %v265, %v264
  %v291 = vpack.c.b16 %v267, %v266
  %v292 = vpack.c.b16 %v269, %v268
  %v293 = vpack.c.b16 %v271, %v270
  %v294 = vpack.c.b16 %v273, %v272
  %v295 = vpack.c.b16 %v275, %v274
  %v296 = vpack.c.b16 %v277, %v276
  %v297 = vpack.c.b16 %v279, %v278
  %v298 = vpack.c.b16 %v281, %v280
  %v299 = vpack.c.b16 %v283, %v282
  %316 = vmatprep.subr.bf16.mxu0 0
  %317 = vmatpush1.bf16.msra.mxu0 %v284
  %318 = vmatprep.subr.bf16.mxu0 0
  %319 = vmatpush1.bf16.msra.mxu0 %v285
  %320 = vmatprep.subr.bf16.mxu0 0
  %321 = vmatpush1.bf16.msra.mxu0 %v286
  %322 = vmatprep.subr.bf16.mxu0 0
  %323 = vmatpush1.bf16.msra.mxu0 %v287
  %324 = vmatprep.subr.bf16.mxu0 0
  %325 = vmatpush1.bf16.msra.mxu0 %v288
  %326 = vmatprep.subr.bf16.mxu0 0
  %327 = vmatpush1.bf16.msra.mxu0 %v289
  %328 = vmatprep.subr.bf16.mxu0 0
  %329 = vmatpush1.bf16.msra.mxu0 %v290
  %330 = vmatprep.subr.bf16.mxu0 0
  %331 = vmatpush1.bf16.msra.mxu0 %v291
  %332 = vmatprep.subr.bf16.mxu0 0
  %333 = vmatpush1.bf16.msra.mxu0 %v292
  %334 = vmatprep.subr.bf16.mxu0 0
  %335 = vmatpush1.bf16.msra.mxu0 %v293
  %336 = vmatprep.subr.bf16.mxu0 0
  %337 = vmatpush1.bf16.msra.mxu0 %v294
  %338 = vmatprep.subr.bf16.mxu0 0
  %339 = vmatpush1.bf16.msra.mxu0 %v295
  %340 = vmatprep.subr.bf16.mxu0 0
  %341 = vmatpush1.bf16.msra.mxu0 %v296
  %342 = vmatprep.subr.bf16.mxu0 0
  %343 = vmatpush1.bf16.msra.mxu0 %v297
  %344 = vmatprep.subr.bf16.mxu0 0
  %345 = vmatpush1.bf16.msra.mxu0 %v298
  %346 = vmatprep.subr.bf16.mxu0 0
  %347 = vmatpush1.bf16.msra.mxu0 %v299
  %348 = vmatprep.mubr.bf16.mxu0 %v180
  %349 = vmatmul.mubr.bf16.gmra.mrb[0].mxu0 %v179
  %v350 = vpop.f32.mrb[0].mxu0
  %v351 = vadd.f32 %v218, %v350
  %v352 = vpop.f32.mrb[0].mxu0
  %v353 = vpop.f32.mrb[0].mxu0
  %v354 = vpop.f32.mrb[0].mxu0
  %355 = vdwg.mxu0
  %v356 = vmax.f32 %v351, 0.0
  %v357 = vpack.c.bf16 %v356, %v356
  %v358 = vld [vmem:[%s5] sm:$0xf]
  %v359 = vld [vmem:[%s5 + $0x4] sm:$0xf]
  %v360 = vld [vmem:[%s5 + $0x8] sm:$0xf]
  %v361 = vld [vmem:[%s5 + $0xc] sm:$0xf]
  %v362 = vld [vmem:[%s5 + $0x10] sm:$0xf]
  %v363 = vld [vmem:[%s5 + $0x14] sm:$0xf]
  %v364 = vld [vmem:[%s5 + $0x18] sm:$0xf]
  %v365 = vld [vmem:[%s5 + $0x1c] sm:$0xf]
  %v366 = vld [vmem:[%s6] sm:$0x1]
  %v368 = vlaneseq
  %v369 = vshrl.u32 %v368, 7
  %v370 = vsub.s32 0, %v369
  %v371 = vrot.slane %v366, %v370
  %v381 = vunpack.c.l.b16 %v358
  %v382 = vunpack.c.l.b16 %v359
  %v383 = vunpack.c.l.b16 %v360
  %v384 = vunpack.c.l.b16 %v361
  %v385 = vunpack.c.l.b16 %v362
  %v386 = vunpack.c.l.b16 %v363
  %v387 = vunpack.c.l.b16 %v364
  %v388 = vunpack.c.l.b16 %v365
  %v389 = vpack.c.b16 %v382, %v381
  %v390 = vpack.c.b16 %v384, %v383
  %v391 = vpack.c.b16 %v386, %v385
  %v392 = vpack.c.b16 %v388, %v387
  %vm397 = vcmask 523264
  %v399 = vsel %vm397, %v357, 0
  %401 = vmatprep.subr.bf16.mxu0 0
  %402 = vmatpush1.bf16.msra.mxu0 %v389
  %403 = vmatprep.subr.bf16.mxu0 0
  %404 = vmatpush1.bf16.msra.mxu0 %v390
  %405 = vmatprep.subr.bf16.mxu0 0
  %406 = vmatpush1.bf16.msra.mxu0 %v391
  %407 = vmatprep.subr.bf16.mxu0 0
  %408 = vmatpush1.bf16.msra.mxu0 %v392
  %409 = vmatprep.subr.bf16.mxu0 0
  %410 = vmatpush1.bf16.msra.mxu0 0
  %411 = vmatprep.subr.bf16.mxu0 0
  %412 = vmatpush1.bf16.msra.mxu0 0
  %413 = vmatprep.subr.bf16.mxu0 0
  %414 = vmatpush1.bf16.msra.mxu0 0
  %415 = vmatprep.subr.bf16.mxu0 0
  %416 = vmatpush1.bf16.msra.mxu0 0
  %417 = vmatprep.subr.bf16.mxu0 0
  %418 = vmatpush1.bf16.msra.mxu0 0
  %419 = vmatprep.subr.bf16.mxu0 0
  %420 = vmatpush1.bf16.msra.mxu0 0
  %421 = vmatprep.subr.bf16.mxu0 0
  %422 = vmatpush1.bf16.msra.mxu0 0
  %423 = vmatprep.subr.bf16.mxu0 0
  %424 = vmatpush1.bf16.msra.mxu0 0
  %425 = vmatprep.subr.bf16.mxu0 0
  %426 = vmatpush1.bf16.msra.mxu0 0
  %427 = vmatprep.subr.bf16.mxu0 0
  %428 = vmatpush1.bf16.msra.mxu0 0
  %429 = vmatprep.subr.bf16.mxu0 0
  %430 = vmatpush1.bf16.msra.mxu0 0
  %431 = vmatprep.subr.bf16.mxu0 0
  %432 = vmatpush1.bf16.msra.mxu0 0
  %433 = vmatprep.mubr.bf16.mxu0 0
  %434 = vmatmul.mubr.bf16.gmra.mrb[0].mxu0 %v399
  %v435 = vpop.f32.mrb[0].mxu0
  %v436 = vadd.f32 %v371, %v435
  %v437 = vpop.f32.mrb[0].mxu0
  %v438 = vpop.f32.mrb[0].mxu0
  %v439 = vpop.f32.mrb[0].mxu0
  %440 = vdwg.mxu0
  %vm441 = vcmask 15360
  %442 = vst.msk [vmem:[%s7] sm:$0xff] %vm441, %v436
  // Predicated region
  $region30: #{hog_classifier_forward.1} parent=0 // pred_check
    _
  $region31: #{hog_classifier_forward.1} parent=0 // pred_check_branch
    %444 = sbr.rel (0) target = $region33
  $region32: #{hog_classifier_forward.1} parent=0 // pred_region
    _
  $region33: #{hog_classifier_forward.1} parent=0 // pred_fallthru
    _
  // Predicated region
  $region34: #{hog_classifier_forward.1} parent=0 // pred_check
    _
  $region35: #{hog_classifier_forward.1} parent=0 // pred_check_branch
    %446 = sbr.rel (0) target = $region37
  $region36: #{hog_classifier_forward.1} parent=0 // pred_region
    _
  $region37: #{hog_classifier_forward.1} parent=0 // pred_fallthru
    _

</llo_original>
